<compile_context>
chip_gen: v7x
topology: tpu7x:2x2x1
jax: 0.10.0
libtpu: 0.0.40
codegen_flags: <defaults>
</compile_context>

<pallas_src>
import jax
import jax.numpy as jnp
from jax.experimental import pallas as pl
from jax.experimental.pallas import tpu as pltpu


def _policy_kernel(x_ref, w1_ref, b1_ref, w2_ref, b2_ref, out_ref):
    g, b, d = x_ref.shape            # (envs_per_step, batch, input_dim)
    n = w2_ref.shape[1]              # true n_actions (no padding)

    # Collapse (env, batch) onto rows so both matmuls are single MXU calls.
    # Leading-dim collapse only (lane dim untouched) -> no relayout copy.
    x = x_ref[...].reshape(g * b, d)

    # hidden = relu(x @ W1 + b1), f32 accumulation on the MXU.
    h = jnp.dot(x, w1_ref[...], preferred_element_type=jnp.float32) + b1_ref[...]
    h = jnp.maximum(h, 0.0)

    # logits = h @ W2 + b2
    logits = jnp.dot(h, w2_ref[...], preferred_element_type=jnp.float32) + b2_ref[...]

    # Per-env softmax over the batch axis (dim=0 of each env's (B, n) logits),
    # exactly like F.softmax(..., dim=0). Reduction runs along the sublane axis.
    l3 = logits.reshape(g, b, n)
    m = jnp.max(l3, axis=1, keepdims=True)
    e = jnp.exp(l3 - m)
    denom = jnp.sum(e, axis=1, keepdims=True)
    # Exact divide: keeps each softmax column summing to 1 to f32 rounding.
    out_ref[...] = (e / denom).astype(out_ref.dtype)


def policy_net_forward_batched(xs, w1, b1, w2, b2, *, num_steps=1):
    """Batched PolicyNet forward over many independent environments.

    xs: (E, B, input_dim)   w1: (input_dim, H)   b1: (1, H)
    w2: (H, n_actions)      b2: (1, n_actions)
    Returns (E, B, n_actions); softmax taken over the B axis of each env.

    num_steps: number of grid steps along the env axis. Use 1 on single-TC
    chips (v5e/v6e); 2 on dual-TC v7x so each core gets one env group.
    Must divide E; otherwise we fall back to a single step (no padding copies).
    """
    E, B, D = xs.shape
    H = w1.shape[1]
    n_actions = w2.shape[1]

    if num_steps < 1 or E % num_steps != 0:
        num_steps = 1
    G = E // num_steps

    grid_spec = pltpu.PrefetchScalarGridSpec(
        num_scalar_prefetch=0,
        grid=(num_steps,),
        in_specs=[
            pl.BlockSpec((G, B, D), lambda e: (e, 0, 0)),
            # Constant block index -> weights stay resident in VMEM across steps.
            pl.BlockSpec((D, H), lambda e: (0, 0)),
            pl.BlockSpec((1, H), lambda e: (0, 0)),
            pl.BlockSpec((H, n_actions), lambda e: (0, 0)),
            pl.BlockSpec((1, n_actions), lambda e: (0, 0)),
        ],
        out_specs=pl.BlockSpec((G, B, n_actions), lambda e: (e, 0, 0)),
    )

    return pl.pallas_call(
        _policy_kernel,
        out_shape=jax.ShapeDtypeStruct((E, B, n_actions), jnp.float32),
        grid_spec=grid_spec,
        compiler_params=pltpu.CompilerParams(
            # Env-group axis is independent (the softmax never crosses it);
            # with num_steps=2 on v7x this shards the groups across both TCs.
            dimension_semantics=("parallel",),
        ),
    )(xs, w1, b1, w2, b2)


def policy_net_forward(x, w1, b1, w2, b2):
    """Single forward matching PolicyNet.forward: x (B, input_dim) -> (B, n_actions).

    For real RL rollouts prefer policy_net_forward_batched — a single ~2.4 kFLOP
    forward is dominated by fixed pallas_call overhead.
    """
    return policy_net_forward_batched(x[None], w1, b1, w2, b2, num_steps=1)[0]


def init_params(key, input_dim, hidden_dim, n_actions):
    """Deterministic init mimicking nn.Linear's default U(-1/sqrt(fan_in), 1/sqrt(fan_in))."""
    k1, k2, k3, k4 = jax.random.split(key, 4)
    lim1 = 1.0 / jnp.sqrt(jnp.float32(input_dim))
    lim2 = 1.0 / jnp.sqrt(jnp.float32(hidden_dim))
    # stored pre-transposed: (in, out)
    w1 = jax.random.uniform(k1, (input_dim, hidden_dim), jnp.float32, -lim1, lim1)
    b1 = jax.random.uniform(k2, (1, hidden_dim), jnp.float32, -lim1, lim1)
    w2 = jax.random.uniform(k3, (hidden_dim, n_actions), jnp.float32, -lim2, lim2)
    b2 = jax.random.uniform(k4, (1, n_actions), jnp.float32, -lim2, lim2)
    return w1, b1, w2, b2


def _reference_forward(x, w1, b1, w2, b2):
    h = jnp.maximum(x @ w1 + b1, 0.0)
    return jax.nn.softmax(h @ w2 + b2, axis=0)


if __name__ == "__main__":
    key = jax.random.PRNGKey(0)
    kx, kp = jax.random.split(key)

    n_envs, batch, input_dim, hidden_dim, n_actions = 32, 8, 16, 32, 8
    xs = jax.random.normal(kx, (n_envs, batch, input_dim), jnp.float32)
    w1, b1, w2, b2 = init_params(kp, input_dim, hidden_dim, n_actions)

    # Reference: the PyTorch forward applied independently to each environment.
    ref = jax.vmap(lambda x: _reference_forward(x, w1, b1, w2, b2))(xs)

    # Single grid step — best default on single-TC v5e/v6e.
    policy = policy_net_forward_batched(xs, w1, b1, w2, b2, num_steps=1)
    jax.block_until_ready(policy)
    assert policy.shape == (n_envs, batch, n_actions)
    assert jnp.allclose(policy, ref, atol=1e-5, rtol=1e-5)
    # softmax over dim=0 => each (env, action) column sums to 1 (exact divide)
    assert jnp.allclose(policy.sum(axis=1), jnp.ones((n_envs, n_actions)), atol=1e-5)

    # Two parallel grid steps — the v7x (dual-TensorCore) configuration.
    policy2 = policy_net_forward_batched(xs, w1, b1, w2, b2, num_steps=2)
    jax.block_until_ready(policy2)
    assert jnp.allclose(policy2, ref, atol=1e-5, rtol=1e-5)

    # Single-env path matching the original nn.Module signature.
    single = policy_net_forward(xs[0], w1, b1, w2, b2)
    jax.block_until_ready(single)
    assert jnp.allclose(single, ref[0], atol=1e-5, rtol=1e-5)

    print("KERNEL_OK")
</pallas_src>

<mosaic_0001>
module attributes {stable_mosaic.version = 11 : i64} {
  func.func @_policy_kernel(%arg0: i32, %arg1: memref<32x8x16xf32, #tpu.memory_space<vmem>>, %arg2: memref<16x32xf32, #tpu.memory_space<vmem>>, %arg3: memref<1x32xf32, #tpu.memory_space<vmem>>, %arg4: memref<32x8xf32, #tpu.memory_space<vmem>>, %arg5: memref<1x8xf32, #tpu.memory_space<vmem>>, %arg6: memref<32x8x8xf32, #tpu.memory_space<vmem>>) attributes {dimension_semantics = [#tpu.dimension_semantics<parallel>], iteration_bounds = array<i64: 1>, scalar_prefetch = 0 : i64, scratch_operands = 0 : i64, tpu.core_type = #tpu.core_type<tc>, window_params = [{transform_indices = @transform_0, window_bounds = array<i64: 32, 8, 16>}, {pipeline_mode = #tpu.pipeline_mode<synchronous>, transform_indices = @transform_1, window_bounds = array<i64: 16, 32>}, {pipeline_mode = #tpu.pipeline_mode<synchronous>, transform_indices = @transform_2, window_bounds = array<i64: 1, 32>}, {pipeline_mode = #tpu.pipeline_mode<synchronous>, transform_indices = @transform_3, window_bounds = array<i64: 32, 8>}, {pipeline_mode = #tpu.pipeline_mode<synchronous>, transform_indices = @transform_4, window_bounds = array<i64: 1, 8>}, {transform_indices = @transform_5, window_bounds = array<i64: 32, 8, 8>}]} {
    %c0 = arith.constant 0 : index
    %c0_0 = arith.constant 0 : index
    %c0_1 = arith.constant 0 : index
    %0 = vector.load %arg1[%c0, %c0_0, %c0_1] : memref<32x8x16xf32, #tpu.memory_space<vmem>>, vector<32x8x16xf32>
    %1 = vector.shape_cast %0 : vector<32x8x16xf32> to vector<256x16xf32>
    %c0_2 = arith.constant 0 : index
    %c0_3 = arith.constant 0 : index
    %2 = vector.load %arg2[%c0_2, %c0_3] : memref<16x32xf32, #tpu.memory_space<vmem>>, vector<16x32xf32>
    %cst = arith.constant dense<0.000000e+00> : vector<256x32xf32>
    %3 = tpu.matmul %1, %2, %cst {dimension_numbers = #tpu.dot_dimension_numbers<[1], [0], [0], [1], [0, 0, 1, 1], [], []>} : vector<256x16xf32>, vector<16x32xf32>, vector<256x32xf32> -> vector<256x32xf32>
    %c0_4 = arith.constant 0 : index
    %c0_5 = arith.constant 0 : index
    %4 = vector.load %arg3[%c0_4, %c0_5] : memref<1x32xf32, #tpu.memory_space<vmem>>, vector<1x32xf32>
    %5 = vector.broadcast %4 : vector<1x32xf32> to vector<256x32xf32>
    %6 = arith.addf %3, %5 : vector<256x32xf32>
    %cst_6 = arith.constant 0.000000e+00 : f32
    %7 = vector.broadcast %cst_6 : f32 to vector<256x32xf32>
    %8 = arith.maximumf %6, %7 : vector<256x32xf32>
    %c0_7 = arith.constant 0 : index
    %c0_8 = arith.constant 0 : index
    %9 = vector.load %arg4[%c0_7, %c0_8] : memref<32x8xf32, #tpu.memory_space<vmem>>, vector<32x8xf32>
    %cst_9 = arith.constant dense<0.000000e+00> : vector<256x8xf32>
    %10 = tpu.matmul %8, %9, %cst_9 {dimension_numbers = #tpu.dot_dimension_numbers<[1], [0], [0], [1], [0, 0, 1, 1], [], []>} : vector<256x32xf32>, vector<32x8xf32>, vector<256x8xf32> -> vector<256x8xf32>
    %c0_10 = arith.constant 0 : index
    %c0_11 = arith.constant 0 : index
    %11 = vector.load %arg5[%c0_10, %c0_11] : memref<1x8xf32, #tpu.memory_space<vmem>>, vector<1x8xf32>
    %12 = vector.broadcast %11 : vector<1x8xf32> to vector<256x8xf32>
    %13 = arith.addf %10, %12 : vector<256x8xf32>
    %14 = vector.shape_cast %13 : vector<256x8xf32> to vector<32x8x8xf32>
    %cst_12 = arith.constant dense<0xFF800000> : vector<32x8xf32>
    %15 = vector.multi_reduction <maximumf>, %14, %cst_12 [1] : vector<32x8x8xf32> to vector<32x8xf32>
    %16 = vector.shape_cast %15 : vector<32x8xf32> to vector<32x1x8xf32>
    %17 = vector.broadcast %16 : vector<32x1x8xf32> to vector<32x8x8xf32>
    %18 = arith.subf %14, %17 : vector<32x8x8xf32>
    %19 = math.exp %18 : vector<32x8x8xf32>
    %cst_13 = arith.constant dense<0.000000e+00> : vector<32x8xf32>
    %20 = vector.multi_reduction <add>, %19, %cst_13 [1] : vector<32x8x8xf32> to vector<32x8xf32>
    %21 = vector.shape_cast %20 : vector<32x8xf32> to vector<32x1x8xf32>
    %22 = vector.broadcast %21 : vector<32x1x8xf32> to vector<32x8x8xf32>
    %23 = arith.divf %19, %22 : vector<32x8x8xf32>
    %c0_14 = arith.constant 0 : index
    %c0_15 = arith.constant 0 : index
    %c0_16 = arith.constant 0 : index
    %24 = vector.load %arg6[%c0_14, %c0_15, %c0_16] : memref<32x8x8xf32, #tpu.memory_space<vmem>>, vector<32x8x8xf32>
    tpu.vector_store %arg6[%c0_14, %c0_15, %c0_16], %23 {strides = array<i32>} : memref<32x8x8xf32, #tpu.memory_space<vmem>>, vector<32x8x8xf32>,
    return
  }
  func.func @transform_0(%arg0: i32) -> (i32, i32, i32) {
    %c0_i32 = arith.constant 0 : i32
    %c0_i32_0 = arith.constant 0 : i32
    %c0_i32_1 = arith.constant 0 : i32
    return %arg0, %c0_i32, %c0_i32_0 : i32, i32, i32
  }
  func.func @transform_1(%arg0: i32) -> (i32, i32) {
    %c0_i32 = arith.constant 0 : i32
    %c0_i32_0 = arith.constant 0 : i32
    %c0_i32_1 = arith.constant 0 : i32
    return %c0_i32, %c0_i32_0 : i32, i32
  }
  func.func @transform_2(%arg0: i32) -> (i32, i32) {
    %c0_i32 = arith.constant 0 : i32
    %c0_i32_0 = arith.constant 0 : i32
    %c0_i32_1 = arith.constant 0 : i32
    return %c0_i32, %c0_i32_0 : i32, i32
  }
  func.func @transform_3(%arg0: i32) -> (i32, i32) {
    %c0_i32 = arith.constant 0 : i32
    %c0_i32_0 = arith.constant 0 : i32
    %c0_i32_1 = arith.constant 0 : i32
    return %c0_i32, %c0_i32_0 : i32, i32
  }
  func.func @transform_4(%arg0: i32) -> (i32, i32) {
    %c0_i32 = arith.constant 0 : i32
    %c0_i32_0 = arith.constant 0 : i32
    %c0_i32_1 = arith.constant 0 : i32
    return %c0_i32, %c0_i32_0 : i32, i32
  }
  func.func @transform_5(%arg0: i32) -> (i32, i32, i32) {
    %c0_i32 = arith.constant 0 : i32
    %c0_i32_0 = arith.constant 0 : i32
    %c0_i32_1 = arith.constant 0 : i32
    return %arg0, %c0_i32, %c0_i32_0 : i32, i32, i32
  }
}

</mosaic_0001>

<llo_original>
// kernel: tpu_custom_call.1
$region0: #{tpu_custom_call.1}
  #allocation0 [shape = 'u32[]', space=smem, size = 0x4, offset = 0x4, fixed_abs, tag = 'smem constant byte address 0x4 - core index']
  #allocation1 [shape = 'u32[144,128]{1,0:T(1,128)}', space=vmem, size = 0x12000, scoped, tag = 'internal scratch']
  %s0 = inlined_call_operand.vmem [shape: f32[32,8,16], index: 0, kind: input, shape index: {}]
  %s1 = inlined_call_operand.vmem [shape: f32[16,32], index: 1, kind: input, shape index: {}]
  %s2 = inlined_call_operand.vmem [shape: f32[1,32], index: 2, kind: input, shape index: {}]
  %s3 = inlined_call_operand.vmem [shape: f32[32,8], index: 3, kind: input, shape index: {}]
  %s4 = inlined_call_operand.vmem [shape: f32[1,8], index: 4, kind: input, shape index: {}]
  %s5 = inlined_call_operand.vmem [shape: f32[32,8,8], index: 5, kind: output, shape index: {}]
  %s6 = sld [smem:[#allocation0]]
  $region30: #{tpu_custom_call.1} parent=0
    _
  %s8 = ssub.s32 1, %s6
  %s9 = scalar_select 0, %s8, %s6
  // Predicated region
  $region2: #{tpu_custom_call.1} parent=0 // pred_check
    _
  $region3: #{tpu_custom_call.1} parent=0 // pred_check_branch
    %11 = sbr.rel (0) target = $region5
  $region4: #{tpu_custom_call.1} parent=0 // pred_region
    _
  $region5: #{tpu_custom_call.1} parent=0 // pred_fallthru
    _
  // Predicated region
  $region6: #{tpu_custom_call.1} parent=0 // pred_check
    _
  $region7: #{tpu_custom_call.1} parent=0 // pred_check_branch
    %13 = sbr.rel (0) target = $region9
  $region8: #{tpu_custom_call.1} parent=0 // pred_region
    _
  $region9: #{tpu_custom_call.1} parent=0 // pred_fallthru
    _
  // Predicated region
  $region10: #{tpu_custom_call.1} parent=0 // pred_check
    _
  $region11: #{tpu_custom_call.1} parent=0 // pred_check_branch
    %15 = sbr.rel (0) target = $region13
  $region12: #{tpu_custom_call.1} parent=0 // pred_region
    _
  $region13: #{tpu_custom_call.1} parent=0 // pred_fallthru
    _
  // Predicated region
  $region14: #{tpu_custom_call.1} parent=0 // pred_check
    _
  $region15: #{tpu_custom_call.1} parent=0 // pred_check_branch
    %17 = sbr.rel (0) target = $region17
  $region16: #{tpu_custom_call.1} parent=0 // pred_region
    _
  $region17: #{tpu_custom_call.1} parent=0 // pred_fallthru
    _
  // Predicated region
  $region18: #{tpu_custom_call.1} parent=0 // pred_check
    _
  $region19: #{tpu_custom_call.1} parent=0 // pred_check_branch
    %19 = sbr.rel (0) target = $region21
  $region20: #{tpu_custom_call.1} parent=0 // pred_region
    _
  $region21: #{tpu_custom_call.1} parent=0 // pred_fallthru
    _
  %v20 = vld [vmem:[%s0] sm:$0xff]
  %v21 = vld [vmem:[%s0 + $0x8] sm:$0xff]
  %v22 = vld [vmem:[%s0 + $0x10] sm:$0xff]
  %v23 = vld [vmem:[%s0 + $0x18] sm:$0xff]
  %v24 = vld [vmem:[%s0 + $0x20] sm:$0xff]
  %v25 = vld [vmem:[%s0 + $0x28] sm:$0xff]
  %v26 = vld [vmem:[%s0 + $0x30] sm:$0xff]
  %v27 = vld [vmem:[%s0 + $0x38] sm:$0xff]
  %v28 = vld [vmem:[%s0 + $0x40] sm:$0xff]
  %v29 = vld [vmem:[%s0 + $0x48] sm:$0xff]
  %v30 = vld [vmem:[%s0 + $0x50] sm:$0xff]
  %v31 = vld [vmem:[%s0 + $0x58] sm:$0xff]
  %v32 = vld [vmem:[%s0 + $0x60] sm:$0xff]
  %v33 = vld [vmem:[%s0 + $0x68] sm:$0xff]
  %v34 = vld [vmem:[%s0 + $0x70] sm:$0xff]
  %v35 = vld [vmem:[%s0 + $0x78] sm:$0xff]
  %v36 = vld [vmem:[%s0 + $0x80] sm:$0xff]
  %v37 = vld [vmem:[%s0 + $0x88] sm:$0xff]
  %v38 = vld [vmem:[%s0 + $0x90] sm:$0xff]
  %v39 = vld [vmem:[%s0 + $0x98] sm:$0xff]
  %v40 = vld [vmem:[%s0 + $0xa0] sm:$0xff]
  %v41 = vld [vmem:[%s0 + $0xa8] sm:$0xff]
  %v42 = vld [vmem:[%s0 + $0xb0] sm:$0xff]
  %v43 = vld [vmem:[%s0 + $0xb8] sm:$0xff]
  %v44 = vld [vmem:[%s0 + $0xc0] sm:$0xff]
  %v45 = vld [vmem:[%s0 + $0xc8] sm:$0xff]
  %v46 = vld [vmem:[%s0 + $0xd0] sm:$0xff]
  %v47 = vld [vmem:[%s0 + $0xd8] sm:$0xff]
  %v48 = vld [vmem:[%s0 + $0xe0] sm:$0xff]
  %v49 = vld [vmem:[%s0 + $0xe8] sm:$0xff]
  %v50 = vld [vmem:[%s0 + $0xf0] sm:$0xff]
  %v51 = vld [vmem:[%s0 + $0xf8] sm:$0xff]
  %v52 = vld [vmem:[%s1] sm:$0xff]
  %v53 = vld [vmem:[%s1 + $0x8] sm:$0xff]
  %v54 = vld [vmem:[%s2] sm:$0x1]
  %v56 = vlaneseq
  %v57 = vshrl.u32 %v56, 7
  %v58 = vsub.s32 0, %v57
  %v59 = vrot.slane %v54, %v58
  %vm61 = vcmask 130048
  %v63 = vsel %vm61, %v20, 0
  %v66 = vsel %vm61, %v21, 0
  %v69 = vsel %vm61, %v22, 0
  %v72 = vsel %vm61, %v23, 0
  %v75 = vsel %vm61, %v24, 0
  %v78 = vsel %vm61, %v25, 0
  %v81 = vsel %vm61, %v26, 0
  %v84 = vsel %vm61, %v27, 0
  %v87 = vsel %vm61, %v28, 0
  %v90 = vsel %vm61, %v29, 0
  %v93 = vsel %vm61, %v30, 0
  %v96 = vsel %vm61, %v31, 0
  %v99 = vsel %vm61, %v32, 0
  %v102 = vsel %vm61, %v33, 0
  %v105 = vsel %vm61, %v34, 0
  %v108 = vsel %vm61, %v35, 0
  %v111 = vsel %vm61, %v36, 0
  %v114 = vsel %vm61, %v37, 0
  %v117 = vsel %vm61, %v38, 0
  %v120 = vsel %vm61, %v39, 0
  %v123 = vsel %vm61, %v40, 0
  %v126 = vsel %vm61, %v41, 0
  %v129 = vsel %vm61, %v42, 0
  %v132 = vsel %vm61, %v43, 0
  %v135 = vsel %vm61, %v44, 0
  %v138 = vsel %vm61, %v45, 0
  %v141 = vsel %vm61, %v46, 0
  %v144 = vsel %vm61, %v47, 0
  %v147 = vsel %vm61, %v48, 0
  %v150 = vsel %vm61, %v49, 0
  %v153 = vsel %vm61, %v50, 0
  %v156 = vsel %vm61, %v51, 0
  %158 = vmatprep.subr.mxu0 0.0
  %159 = vmatpush1.msra.mxu0 %v52
  %160 = vmatprep.subr.mxu0 0.0
  %161 = vmatpush1.msra.mxu0 %v53
  %162 = vmatprep.subr.mxu0 0.0
  %163 = vmatpush1.msra.mxu0 0.0
  %164 = vmatprep.subr.mxu0 0.0
  %165 = vmatpush1.msra.mxu0 0.0
  %166 = vmatprep.subr.mxu0 0.0
  %167 = vmatpush1.msra.mxu0 0.0
  %168 = vmatprep.subr.mxu0 0.0
  %169 = vmatpush1.msra.mxu0 0.0
  %170 = vmatprep.subr.mxu0 0.0
  %171 = vmatpush1.msra.mxu0 0.0
  %172 = vmatprep.subr.mxu0 0.0
  %173 = vmatpush1.msra.mxu0 0.0
  %174 = vmatprep.subr.mxu0 0.0
  %175 = vmatpush1.msra.mxu0 0.0
  %176 = vmatprep.subr.mxu0 0.0
  %177 = vmatpush1.msra.mxu0 0.0
  %178 = vmatprep.subr.mxu0 0.0
  %179 = vmatpush1.msra.mxu0 0.0
  %180 = vmatprep.subr.mxu0 0.0
  %181 = vmatpush1.msra.mxu0 0.0
  %182 = vmatprep.subr.mxu0 0.0
  %183 = vmatpush1.msra.mxu0 0.0
  %184 = vmatprep.subr.mxu0 0.0
  %185 = vmatpush1.msra.mxu0 0.0
  %186 = vmatprep.subr.mxu0 0.0
  %187 = vmatpush1.msra.mxu0 0.0
  %188 = vmatprep.subr.mxu0 0.0
  %189 = vmatpush1.msra.mxu0 0.0
  %190 = vmatprep.subr.mxu0 0.0
  %191 = vmatpush1.msra.mxu0 0.0
  %192 = vmatprep.subr.mxu0 0.0
  %193 = vmatpush1.msra.mxu0 0.0
  %194 = vmatprep.subr.mxu0 0.0
  %195 = vmatpush1.msra.mxu0 0.0
  %196 = vmatprep.subr.mxu0 0.0
  %197 = vmatpush1.msra.mxu0 0.0
  %198 = vmatprep.subr.mxu0 0.0
  %199 = vmatpush1.msra.mxu0 0.0
  %200 = vmatprep.subr.mxu0 0.0
  %201 = vmatpush1.msra.mxu0 0.0
  %202 = vmatprep.subr.mxu0 0.0
  %203 = vmatpush1.msra.mxu0 0.0
  %204 = vmatprep.subr.mxu0 0.0
  %205 = vmatpush1.msra.mxu0 0.0
  %206 = vmatprep.subr.mxu0 0.0
  %207 = vmatpush1.msra.mxu0 0.0
  %208 = vmatprep.subr.mxu0 0.0
  %209 = vmatpush1.msra.mxu0 0.0
  %210 = vmatprep.subr.mxu0 0.0
  %211 = vmatpush1.msra.mxu0 0.0
  %212 = vmatprep.subr.mxu0 0.0
  %213 = vmatpush1.msra.mxu0 0.0
  %214 = vmatprep.subr.mxu0 0.0
  %215 = vmatpush1.msra.mxu0 0.0
  %216 = vmatprep.subr.mxu0 0.0
  %217 = vmatpush1.msra.mxu0 0.0
  %218 = vmatprep.subr.mxu0 0.0
  %219 = vmatpush1.msra.mxu0 0.0
  %220 = vmatprep.subr.mxu0 0.0
  %221 = vmatpush1.msra.mxu0 0.0
  %222 = vmatprep.mubr.f32.mxu0 0.0
  %223 = vmatmul.mubr.f32.gmra.mrb[0].mxu0 %v63
  %v224 = vpop.f32.mrb[0].mxu0
  %v225 = vadd.f32 %v59, %v224
  %v226 = vpop.f32.mrb[0].mxu0
  %227 = vmatprep.mubr.f32.mxu0 0.0
  %228 = vmatmul.mubr.f32.gmra.mrb[0].mxu0 %v66
  %v229 = vpop.f32.mrb[0].mxu0
  %v230 = vadd.f32 %v59, %v229
  %v231 = vpop.f32.mrb[0].mxu0
  %232 = vmatprep.mubr.f32.mxu0 0.0
  %233 = vmatmul.mubr.f32.gmra.mrb[0].mxu0 %v69
  %v234 = vpop.f32.mrb[0].mxu0
  %v235 = vadd.f32 %v59, %v234
  %v236 = vpop.f32.mrb[0].mxu0
  %237 = vmatprep.mubr.f32.mxu0 0.0
  %238 = vmatmul.mubr.f32.gmra.mrb[0].mxu0 %v72
  %v239 = vpop.f32.mrb[0].mxu0
  %v240 = vadd.f32 %v59, %v239
  %v241 = vpop.f32.mrb[0].mxu0
  %242 = vmatprep.mubr.f32.mxu0 0.0
  %243 = vmatmul.mubr.f32.gmra.mrb[0].mxu0 %v75
  %v244 = vpop.f32.mrb[0].mxu0
  %v245 = vadd.f32 %v59, %v244
  %v246 = vpop.f32.mrb[0].mxu0
  %247 = vmatprep.mubr.f32.mxu0 0.0
  %248 = vmatmul.mubr.f32.gmra.mrb[0].mxu0 %v78
  %v249 = vpop.f32.mrb[0].mxu0
  %v250 = vadd.f32 %v59, %v249
  %v251 = vpop.f32.mrb[0].mxu0
  %252 = vmatprep.mubr.f32.mxu0 0.0
  %253 = vmatmul.mubr.f32.gmra.mrb[0].mxu0 %v81
  %v254 = vpop.f32.mrb[0].mxu0
  %v255 = vadd.f32 %v59, %v254
  %v256 = vpop.f32.mrb[0].mxu0
  %257 = vmatprep.mubr.f32.mxu0 0.0
  %258 = vmatmul.mubr.f32.gmra.mrb[0].mxu0 %v84
  %v259 = vpop.f32.mrb[0].mxu0
  %v260 = vadd.f32 %v59, %v259
  %v261 = vpop.f32.mrb[0].mxu0
  %262 = vmatprep.mubr.f32.mxu0 0.0
  %263 = vmatmul.mubr.f32.gmra.mrb[0].mxu0 %v87
  %v264 = vpop.f32.mrb[0].mxu0
  %v265 = vadd.f32 %v59, %v264
  %v266 = vpop.f32.mrb[0].mxu0
  %267 = vmatprep.mubr.f32.mxu0 0.0
  %268 = vmatmul.mubr.f32.gmra.mrb[0].mxu0 %v90
  %v269 = vpop.f32.mrb[0].mxu0
  %v270 = vadd.f32 %v59, %v269
  %v271 = vpop.f32.mrb[0].mxu0
  %272 = vmatprep.mubr.f32.mxu0 0.0
  %273 = vmatmul.mubr.f32.gmra.mrb[0].mxu0 %v93
  %v274 = vpop.f32.mrb[0].mxu0
  %v275 = vadd.f32 %v59, %v274
  %v276 = vpop.f32.mrb[0].mxu0
  %277 = vmatprep.mubr.f32.mxu0 0.0
  %278 = vmatmul.mubr.f32.gmra.mrb[0].mxu0 %v96
  %v279 = vpop.f32.mrb[0].mxu0
  %v280 = vadd.f32 %v59, %v279
  %v281 = vpop.f32.mrb[0].mxu0
  %282 = vmatprep.mubr.f32.mxu0 0.0
  %283 = vmatmul.mubr.f32.gmra.mrb[0].mxu0 %v99
  %v284 = vpop.f32.mrb[0].mxu0
  %v285 = vadd.f32 %v59, %v284
  %v286 = vpop.f32.mrb[0].mxu0
  %287 = vmatprep.mubr.f32.mxu0 0.0
  %288 = vmatmul.mubr.f32.gmra.mrb[0].mxu0 %v102
  %v289 = vpop.f32.mrb[0].mxu0
  %v290 = vadd.f32 %v59, %v289
  %v291 = vpop.f32.mrb[0].mxu0
  %292 = vmatprep.mubr.f32.mxu0 0.0
  %293 = vmatmul.mubr.f32.gmra.mrb[0].mxu0 %v105
  %v294 = vpop.f32.mrb[0].mxu0
  %v295 = vadd.f32 %v59, %v294
  %v296 = vpop.f32.mrb[0].mxu0
  %297 = vmatprep.mubr.f32.mxu0 0.0
  %298 = vmatmul.mubr.f32.gmra.mrb[0].mxu0 %v108
  %v299 = vpop.f32.mrb[0].mxu0
  %v300 = vadd.f32 %v59, %v299
  %v301 = vpop.f32.mrb[0].mxu0
  %302 = vmatprep.mubr.f32.mxu0 0.0
  %303 = vmatmul.mubr.f32.gmra.mrb[0].mxu0 %v111
  %v304 = vpop.f32.mrb[0].mxu0
  %v305 = vadd.f32 %v59, %v304
  %v306 = vpop.f32.mrb[0].mxu0
  %307 = vmatprep.mubr.f32.mxu0 0.0
  %308 = vmatmul.mubr.f32.gmra.mrb[0].mxu0 %v114
  %v309 = vpop.f32.mrb[0].mxu0
  %v310 = vadd.f32 %v59, %v309
  %v311 = vpop.f32.mrb[0].mxu0
  %312 = vmatprep.mubr.f32.mxu0 0.0
  %313 = vmatmul.mubr.f32.gmra.mrb[0].mxu0 %v117
  %v314 = vpop.f32.mrb[0].mxu0
  %v315 = vadd.f32 %v59, %v314
  %v316 = vpop.f32.mrb[0].mxu0
  %317 = vmatprep.mubr.f32.mxu0 0.0
  %318 = vmatmul.mubr.f32.gmra.mrb[0].mxu0 %v120
  %v319 = vpop.f32.mrb[0].mxu0
  %v320 = vadd.f32 %v59, %v319
  %v321 = vpop.f32.mrb[0].mxu0
  %322 = vmatprep.mubr.f32.mxu0 0.0
  %323 = vmatmul.mubr.f32.gmra.mrb[0].mxu0 %v123
  %v324 = vpop.f32.mrb[0].mxu0
  %v325 = vadd.f32 %v59, %v324
  %v326 = vpop.f32.mrb[0].mxu0
  %327 = vmatprep.mubr.f32.mxu0 0.0
  %328 = vmatmul.mubr.f32.gmra.mrb[0].mxu0 %v126
  %v329 = vpop.f32.mrb[0].mxu0
  %v330 = vadd.f32 %v59, %v329
  %v331 = vpop.f32.mrb[0].mxu0
  %332 = vmatprep.mubr.f32.mxu0 0.0
  %333 = vmatmul.mubr.f32.gmra.mrb[0].mxu0 %v129
  %v334 = vpop.f32.mrb[0].mxu0
  %v335 = vadd.f32 %v59, %v334
  %v336 = vpop.f32.mrb[0].mxu0
  %337 = vmatprep.mubr.f32.mxu0 0.0
  %338 = vmatmul.mubr.f32.gmra.mrb[0].mxu0 %v132
  %v339 = vpop.f32.mrb[0].mxu0
  %v340 = vadd.f32 %v59, %v339
  %v341 = vpop.f32.mrb[0].mxu0
  %342 = vmatprep.mubr.f32.mxu0 0.0
  %343 = vmatmul.mubr.f32.gmra.mrb[0].mxu0 %v135
  %v344 = vpop.f32.mrb[0].mxu0
  %v345 = vadd.f32 %v59, %v344
  %v346 = vpop.f32.mrb[0].mxu0
  %347 = vmatprep.mubr.f32.mxu0 0.0
  %348 = vmatmul.mubr.f32.gmra.mrb[0].mxu0 %v138
  %v349 = vpop.f32.mrb[0].mxu0
  %v350 = vadd.f32 %v59, %v349
  %v351 = vpop.f32.mrb[0].mxu0
  %352 = vmatprep.mubr.f32.mxu0 0.0
  %353 = vmatmul.mubr.f32.gmra.mrb[0].mxu0 %v141
  %v354 = vpop.f32.mrb[0].mxu0
  %v355 = vadd.f32 %v59, %v354
  %v356 = vpop.f32.mrb[0].mxu0
  %357 = vmatprep.mubr.f32.mxu0 0.0
  %358 = vmatmul.mubr.f32.gmra.mrb[0].mxu0 %v144
  %v359 = vpop.f32.mrb[0].mxu0
  %v360 = vadd.f32 %v59, %v359
  %v361 = vpop.f32.mrb[0].mxu0
  %362 = vmatprep.mubr.f32.mxu0 0.0
  %363 = vmatmul.mubr.f32.gmra.mrb[0].mxu0 %v147
  %v364 = vpop.f32.mrb[0].mxu0
  %v365 = vadd.f32 %v59, %v364
  %v366 = vpop.f32.mrb[0].mxu0
  %367 = vmatprep.mubr.f32.mxu0 0.0
  %368 = vmatmul.mubr.f32.gmra.mrb[0].mxu0 %v150
  %v369 = vpop.f32.mrb[0].mxu0
  %v370 = vadd.f32 %v59, %v369
  %v371 = vpop.f32.mrb[0].mxu0
  %372 = vmatprep.mubr.f32.mxu0 0.0
  %373 = vmatmul.mubr.f32.gmra.mrb[0].mxu0 %v153
  %v374 = vpop.f32.mrb[0].mxu0
  %v375 = vadd.f32 %v59, %v374
  %v376 = vpop.f32.mrb[0].mxu0
  %377 = vmatprep.mubr.f32.mxu0 0.0
  %378 = vmatmul.mubr.f32.gmra.mrb[0].mxu0 %v156
  %v379 = vpop.f32.mrb[0].mxu0
  %v380 = vadd.f32 %v59, %v379
  %v381 = vpop.f32.mrb[0].mxu0
  %382 = vdwg.mxu0
  %v383 = vmax.f32 %v225, 0.0
  %v384 = vmax.f32 %v230, 0.0
  %v385 = vmax.f32 %v235, 0.0
  %v386 = vmax.f32 %v240, 0.0
  %v387 = vmax.f32 %v245, 0.0
  %v388 = vmax.f32 %v250, 0.0
  %v389 = vmax.f32 %v255, 0.0
  %v390 = vmax.f32 %v260, 0.0
  %v391 = vmax.f32 %v265, 0.0
  %v392 = vmax.f32 %v270, 0.0
  %v393 = vmax.f32 %v275, 0.0
  %v394 = vmax.f32 %v280, 0.0
  %v395 = vmax.f32 %v285, 0.0
  %v396 = vmax.f32 %v290, 0.0
  %v397 = vmax.f32 %v295, 0.0
  %v398 = vmax.f32 %v300, 0.0
  %v399 = vmax.f32 %v305, 0.0
  %v400 = vmax.f32 %v310, 0.0
  %v401 = vmax.f32 %v315, 0.0
  %v402 = vmax.f32 %v320, 0.0
  %v403 = vmax.f32 %v325, 0.0
  %v404 = vmax.f32 %v330, 0.0
  %v405 = vmax.f32 %v335, 0.0
  %v406 = vmax.f32 %v340, 0.0
  %v407 = vmax.f32 %v345, 0.0
  %v408 = vmax.f32 %v350, 0.0
  %v409 = vmax.f32 %v355, 0.0
  %v410 = vmax.f32 %v360, 0.0
  %v411 = vmax.f32 %v365, 0.0
  %v412 = vmax.f32 %v370, 0.0
  %v413 = vmax.f32 %v375, 0.0
  %v414 = vmax.f32 %v380, 0.0
  %v415 = vld [vmem:[%s3] sm:$0xff]
  %v416 = vld [vmem:[%s3 + $0x8] sm:$0xff]
  %v417 = vld [vmem:[%s3 + $0x10] sm:$0xff]
  %v418 = vld [vmem:[%s3 + $0x18] sm:$0xff]
  %v419 = vld [vmem:[%s4] sm:$0x1]
  %v421 = vlaneseq
  %v422 = vshrl.u32 %v421, 7
  %v423 = vsub.s32 0, %v422
  %v424 = vrot.slane %v419, %v423
  %vm426 = vcmask 261120
  %v428 = vsel %vm426, %v383, 0
  %v431 = vsel %vm426, %v384, 0
  %v434 = vsel %vm426, %v385, 0
  %v437 = vsel %vm426, %v386, 0
  %v440 = vsel %vm426, %v387, 0
  %v443 = vsel %vm426, %v388, 0
  %v446 = vsel %vm426, %v389, 0
  %v449 = vsel %vm426, %v390, 0
  %v452 = vsel %vm426, %v391, 0
  %v455 = vsel %vm426, %v392, 0
  %v458 = vsel %vm426, %v393, 0
  %v461 = vsel %vm426, %v394, 0
  %v464 = vsel %vm426, %v395, 0
  %v467 = vsel %vm426, %v396, 0
  %v470 = vsel %vm426, %v397, 0
  %v473 = vsel %vm426, %v398, 0
  %v476 = vsel %vm426, %v399, 0
  %v479 = vsel %vm426, %v400, 0
  %v482 = vsel %vm426, %v401, 0
  %v485 = vsel %vm426, %v402, 0
  %v488 = vsel %vm426, %v403, 0
  %v491 = vsel %vm426, %v404, 0
  %v494 = vsel %vm426, %v405, 0
  %v497 = vsel %vm426, %v406, 0
  %v500 = vsel %vm426, %v407, 0
  %v503 = vsel %vm426, %v408, 0
  %v506 = vsel %vm426, %v409, 0
  %v509 = vsel %vm426, %v410, 0
  %v512 = vsel %vm426, %v411, 0
  %v515 = vsel %vm426, %v412, 0
  %v518 = vsel %vm426, %v413, 0
  %v521 = vsel %vm426, %v414, 0
  %523 = vmatprep.subr.mxu0 0.0
  %524 = vmatpush1.msra.mxu0 %v415
  %525 = vmatprep.subr.mxu0 0.0
  %526 = vmatpush1.msra.mxu0 %v416
  %527 = vmatprep.subr.mxu0 0.0
  %528 = vmatpush1.msra.mxu0 %v417
  %529 = vmatprep.subr.mxu0 0.0
  %530 = vmatpush1.msra.mxu0 %v418
  %531 = vmatprep.subr.mxu0 0.0
  %532 = vmatpush1.msra.mxu0 0.0
  %533 = vmatprep.subr.mxu0 0.0
  %534 = vmatpush1.msra.mxu0 0.0
  %535 = vmatprep.subr.mxu0 0.0
  %536 = vmatpush1.msra.mxu0 0.0
  %537 = vmatprep.subr.mxu0 0.0
  %538 = vmatpush1.msra.mxu0 0.0
  %539 = vmatprep.subr.mxu0 0.0
  %540 = vmatpush1.msra.mxu0 0.0
  %541 = vmatprep.subr.mxu0 0.0
  %542 = vmatpush1.msra.mxu0 0.0
  %543 = vmatprep.subr.mxu0 0.0
  %544 = vmatpush1.msra.mxu0 0.0
  %545 = vmatprep.subr.mxu0 0.0
  %546 = vmatpush1.msra.mxu0 0.0
  %547 = vmatprep.subr.mxu0 0.0
  %548 = vmatpush1.msra.mxu0 0.0
  %549 = vmatprep.subr.mxu0 0.0
  %550 = vmatpush1.msra.mxu0 0.0
  %551 = vmatprep.subr.mxu0 0.0
  %552 = vmatpush1.msra.mxu0 0.0
  %553 = vmatprep.subr.mxu0 0.0
  %554 = vmatpush1.msra.mxu0 0.0
  %555 = vmatprep.subr.mxu0 0.0
  %556 = vmatpush1.msra.mxu0 0.0
  %557 = vmatprep.subr.mxu0 0.0
  %558 = vmatpush1.msra.mxu0 0.0
  %559 = vmatprep.subr.mxu0 0.0
  %560 = vmatpush1.msra.mxu0 0.0
  %561 = vmatprep.subr.mxu0 0.0
  %562 = vmatpush1.msra.mxu0 0.0
  %563 = vmatprep.subr.mxu0 0.0
  %564 = vmatpush1.msra.mxu0 0.0
  %565 = vmatprep.subr.mxu0 0.0
  %566 = vmatpush1.msra.mxu0 0.0
  %567 = vmatprep.subr.mxu0 0.0
  %568 = vmatpush1.msra.mxu0 0.0
  %569 = vmatprep.subr.mxu0 0.0
  %570 = vmatpush1.msra.mxu0 0.0
  %571 = vmatprep.subr.mxu0 0.0
  %572 = vmatpush1.msra.mxu0 0.0
  %573 = vmatprep.subr.mxu0 0.0
  %574 = vmatpush1.msra.mxu0 0.0
  %575 = vmatprep.subr.mxu0 0.0
  %576 = vmatpush1.msra.mxu0 0.0
  %577 = vmatprep.subr.mxu0 0.0
  %578 = vmatpush1.msra.mxu0 0.0
  %579 = vmatprep.subr.mxu0 0.0
  %580 = vmatpush1.msra.mxu0 0.0
  %581 = vmatprep.subr.mxu0 0.0
  %582 = vmatpush1.msra.mxu0 0.0
  %583 = vmatprep.subr.mxu0 0.0
  %584 = vmatpush1.msra.mxu0 0.0
  %585 = vmatprep.subr.mxu0 0.0
  %586 = vmatpush1.msra.mxu0 0.0
  %587 = vmatprep.mubr.f32.mxu0 0.0
  %588 = vmatmul.mubr.f32.gmra.mrb[0].mxu0 %v428
  %v589 = vpop.f32.mrb[0].mxu0
  %v590 = vadd.f32 %v424, %v589
  %v591 = vpop.f32.mrb[0].mxu0
  %592 = vmatprep.mubr.f32.mxu0 0.0
  %593 = vmatmul.mubr.f32.gmra.mrb[0].mxu0 %v431
  %v594 = vpop.f32.mrb[0].mxu0
  %v595 = vadd.f32 %v424, %v594
  %v596 = vpop.f32.mrb[0].mxu0
  %597 = vmatprep.mubr.f32.mxu0 0.0
  %598 = vmatmul.mubr.f32.gmra.mrb[0].mxu0 %v434
  %v599 = vpop.f32.mrb[0].mxu0
  %v600 = vadd.f32 %v424, %v599
  %v601 = vpop.f32.mrb[0].mxu0
  %602 = vmatprep.mubr.f32.mxu0 0.0
  %603 = vmatmul.mubr.f32.gmra.mrb[0].mxu0 %v437
  %v604 = vpop.f32.mrb[0].mxu0
  %v605 = vadd.f32 %v424, %v604
  %v606 = vpop.f32.mrb[0].mxu0
  %607 = vmatprep.mubr.f32.mxu0 0.0
  %608 = vmatmul.mubr.f32.gmra.mrb[0].mxu0 %v440
  %v609 = vpop.f32.mrb[0].mxu0
  %v610 = vadd.f32 %v424, %v609
  %v611 = vpop.f32.mrb[0].mxu0
  %612 = vmatprep.mubr.f32.mxu0 0.0
  %613 = vmatmul.mubr.f32.gmra.mrb[0].mxu0 %v443
  %v614 = vpop.f32.mrb[0].mxu0
  %v615 = vadd.f32 %v424, %v614
  %v616 = vpop.f32.mrb[0].mxu0
  %617 = vmatprep.mubr.f32.mxu0 0.0
  %618 = vmatmul.mubr.f32.gmra.mrb[0].mxu0 %v446
  %v619 = vpop.f32.mrb[0].mxu0
  %v620 = vadd.f32 %v424, %v619
  %v621 = vpop.f32.mrb[0].mxu0
  %622 = vmatprep.mubr.f32.mxu0 0.0
  %623 = vmatmul.mubr.f32.gmra.mrb[0].mxu0 %v449
  %v624 = vpop.f32.mrb[0].mxu0
  %v625 = vadd.f32 %v424, %v624
  %v626 = vpop.f32.mrb[0].mxu0
  %627 = vmatprep.mubr.f32.mxu0 0.0
  %628 = vmatmul.mubr.f32.gmra.mrb[0].mxu0 %v452
  %v629 = vpop.f32.mrb[0].mxu0
  %v630 = vadd.f32 %v424, %v629
  %v631 = vpop.f32.mrb[0].mxu0
  %632 = vmatprep.mubr.f32.mxu0 0.0
  %633 = vmatmul.mubr.f32.gmra.mrb[0].mxu0 %v455
  %v634 = vpop.f32.mrb[0].mxu0
  %v635 = vadd.f32 %v424, %v634
  %v636 = vpop.f32.mrb[0].mxu0
  %637 = vmatprep.mubr.f32.mxu0 0.0
  %638 = vmatmul.mubr.f32.gmra.mrb[0].mxu0 %v458
  %v639 = vpop.f32.mrb[0].mxu0
  %v640 = vadd.f32 %v424, %v639
  %v641 = vpop.f32.mrb[0].mxu0
  %642 = vmatprep.mubr.f32.mxu0 0.0
  %643 = vmatmul.mubr.f32.gmra.mrb[0].mxu0 %v461
  %v644 = vpop.f32.mrb[0].mxu0
  %v645 = vadd.f32 %v424, %v644
  %v646 = vpop.f32.mrb[0].mxu0
  %647 = vmatprep.mubr.f32.mxu0 0.0
  %648 = vmatmul.mubr.f32.gmra.mrb[0].mxu0 %v464
  %v649 = vpop.f32.mrb[0].mxu0
  %v650 = vadd.f32 %v424, %v649
  %v651 = vpop.f32.mrb[0].mxu0
  %652 = vmatprep.mubr.f32.mxu0 0.0
  %653 = vmatmul.mubr.f32.gmra.mrb[0].mxu0 %v467
  %v654 = vpop.f32.mrb[0].mxu0
  %v655 = vadd.f32 %v424, %v654
  %v656 = vpop.f32.mrb[0].mxu0
  %657 = vmatprep.mubr.f32.mxu0 0.0
  %658 = vmatmul.mubr.f32.gmra.mrb[0].mxu0 %v470
  %v659 = vpop.f32.mrb[0].mxu0
  %v660 = vadd.f32 %v424, %v659
  %v661 = vpop.f32.mrb[0].mxu0
  %662 = vmatprep.mubr.f32.mxu0 0.0
  %663 = vmatmul.mubr.f32.gmra.mrb[0].mxu0 %v473
  %v664 = vpop.f32.mrb[0].mxu0
  %v665 = vadd.f32 %v424, %v664
  %v666 = vpop.f32.mrb[0].mxu0
  %667 = vmatprep.mubr.f32.mxu0 0.0
  %668 = vmatmul.mubr.f32.gmra.mrb[0].mxu0 %v476
  %v669 = vpop.f32.mrb[0].mxu0
  %v670 = vadd.f32 %v424, %v669
  %v671 = vpop.f32.mrb[0].mxu0
  %672 = vmatprep.mubr.f32.mxu0 0.0
  %673 = vmatmul.mubr.f32.gmra.mrb[0].mxu0 %v479
  %v674 = vpop.f32.mrb[0].mxu0
  %v675 = vadd.f32 %v424, %v674
  %v676 = vpop.f32.mrb[0].mxu0
  %677 = vmatprep.mubr.f32.mxu0 0.0
  %678 = vmatmul.mubr.f32.gmra.mrb[0].mxu0 %v482
  %v679 = vpop.f32.mrb[0].mxu0
  %v680 = vadd.f32 %v424, %v679
  %v681 = vpop.f32.mrb[0].mxu0
  %682 = vmatprep.mubr.f32.mxu0 0.0
  %683 = vmatmul.mubr.f32.gmra.mrb[0].mxu0 %v485
  %v684 = vpop.f32.mrb[0].mxu0
  %v685 = vadd.f32 %v424, %v684
  %v686 = vpop.f32.mrb[0].mxu0
  %687 = vmatprep.mubr.f32.mxu0 0.0
  %688 = vmatmul.mubr.f32.gmra.mrb[0].mxu0 %v488
  %v689 = vpop.f32.mrb[0].mxu0
  %v690 = vadd.f32 %v424, %v689
  %v691 = vpop.f32.mrb[0].mxu0
  %692 = vmatprep.mubr.f32.mxu0 0.0
  %693 = vmatmul.mubr.f32.gmra.mrb[0].mxu0 %v491
  %v694 = vpop.f32.mrb[0].mxu0
  %v695 = vadd.f32 %v424, %v694
  %v696 = vpop.f32.mrb[0].mxu0
  %697 = vmatprep.mubr.f32.mxu0 0.0
  %698 = vmatmul.mubr.f32.gmra.mrb[0].mxu0 %v494
  %v699 = vpop.f32.mrb[0].mxu0
  %v700 = vadd.f32 %v424, %v699
  %v701 = vpop.f32.mrb[0].mxu0
  %702 = vmatprep.mubr.f32.mxu0 0.0
  %703 = vmatmul.mubr.f32.gmra.mrb[0].mxu0 %v497
  %v704 = vpop.f32.mrb[0].mxu0
  %v705 = vadd.f32 %v424, %v704
  %v706 = vpop.f32.mrb[0].mxu0
  %707 = vmatprep.mubr.f32.mxu0 0.0
  %708 = vmatmul.mubr.f32.gmra.mrb[0].mxu0 %v500
  %v709 = vpop.f32.mrb[0].mxu0
  %v710 = vadd.f32 %v424, %v709
  %v711 = vpop.f32.mrb[0].mxu0
  %712 = vmatprep.mubr.f32.mxu0 0.0
  %713 = vmatmul.mubr.f32.gmra.mrb[0].mxu0 %v503
  %v714 = vpop.f32.mrb[0].mxu0
  %v715 = vadd.f32 %v424, %v714
  %v716 = vpop.f32.mrb[0].mxu0
  %717 = vmatprep.mubr.f32.mxu0 0.0
  %718 = vmatmul.mubr.f32.gmra.mrb[0].mxu0 %v506
  %v719 = vpop.f32.mrb[0].mxu0
  %v720 = vadd.f32 %v424, %v719
  %v721 = vpop.f32.mrb[0].mxu0
  %722 = vmatprep.mubr.f32.mxu0 0.0
  %723 = vmatmul.mubr.f32.gmra.mrb[0].mxu0 %v509
  %v724 = vpop.f32.mrb[0].mxu0
  %v725 = vadd.f32 %v424, %v724
  %v726 = vpop.f32.mrb[0].mxu0
  %727 = vmatprep.mubr.f32.mxu0 0.0
  %728 = vmatmul.mubr.f32.gmra.mrb[0].mxu0 %v512
  %v729 = vpop.f32.mrb[0].mxu0
  %v730 = vadd.f32 %v424, %v729
  %v731 = vpop.f32.mrb[0].mxu0
  %732 = vmatprep.mubr.f32.mxu0 0.0
  %733 = vmatmul.mubr.f32.gmra.mrb[0].mxu0 %v515
  %v734 = vpop.f32.mrb[0].mxu0
  %v735 = vadd.f32 %v424, %v734
  %v736 = vpop.f32.mrb[0].mxu0
  %737 = vmatprep.mubr.f32.mxu0 0.0
  %738 = vmatmul.mubr.f32.gmra.mrb[0].mxu0 %v518
  %v739 = vpop.f32.mrb[0].mxu0
  %v740 = vadd.f32 %v424, %v739
  %v741 = vpop.f32.mrb[0].mxu0
  %742 = vmatprep.mubr.f32.mxu0 0.0
  %743 = vmatmul.mubr.f32.gmra.mrb[0].mxu0 %v521
  %v744 = vpop.f32.mrb[0].mxu0
  %v745 = vadd.f32 %v424, %v744
  %v746 = vpop.f32.mrb[0].mxu0
  %747 = vdwg.mxu0
  %vm748 = vcmask 64512
  %v749 = vsel %vm748, %v590, -inf
  %v750 = vrot.slane %v749, 4
  %v751 = vmax.f32 %v749, %v750
  %v752 = vrot.slane %v751, 2
  %v753 = vmax.f32 %v751, %v752
  %v754 = vrot.slane %v753, 1
  %v755 = vmax.f32 %v753, %v754
  %v756 = vsel %vm748, %v595, -inf
  %v757 = vrot.slane %v756, 4
  %v758 = vmax.f32 %v756, %v757
  %v759 = vrot.slane %v758, 2
  %v760 = vmax.f32 %v758, %v759
  %v761 = vrot.slane %v760, 1
  %v762 = vmax.f32 %v760, %v761
  %v763 = vsel %vm748, %v600, -inf
  %v764 = vrot.slane %v763, 4
  %v765 = vmax.f32 %v763, %v764
  %v766 = vrot.slane %v765, 2
  %v767 = vmax.f32 %v765, %v766
  %v768 = vrot.slane %v767, 1
  %v769 = vmax.f32 %v767, %v768
  %v770 = vsel %vm748, %v605, -inf
  %v771 = vrot.slane %v770, 4
  %v772 = vmax.f32 %v770, %v771
  %v773 = vrot.slane %v772, 2
  %v774 = vmax.f32 %v772, %v773
  %v775 = vrot.slane %v774, 1
  %v776 = vmax.f32 %v774, %v775
  %v777 = vsel %vm748, %v610, -inf
  %v778 = vrot.slane %v777, 4
  %v779 = vmax.f32 %v777, %v778
  %v780 = vrot.slane %v779, 2
  %v781 = vmax.f32 %v779, %v780
  %v782 = vrot.slane %v781, 1
  %v783 = vmax.f32 %v781, %v782
  %v784 = vsel %vm748, %v615, -inf
  %v785 = vrot.slane %v784, 4
  %v786 = vmax.f32 %v784, %v785
  %v787 = vrot.slane %v786, 2
  %v788 = vmax.f32 %v786, %v787
  %v789 = vrot.slane %v788, 1
  %v790 = vmax.f32 %v788, %v789
  %v791 = vsel %vm748, %v620, -inf
  %v792 = vrot.slane %v791, 4
  %v793 = vmax.f32 %v791, %v792
  %v794 = vrot.slane %v793, 2
  %v795 = vmax.f32 %v793, %v794
  %v796 = vrot.slane %v795, 1
  %v797 = vmax.f32 %v795, %v796
  %v798 = vsel %vm748, %v625, -inf
  %v799 = vrot.slane %v798, 4
  %v800 = vmax.f32 %v798, %v799
  %v801 = vrot.slane %v800, 2
  %v802 = vmax.f32 %v800, %v801
  %v803 = vrot.slane %v802, 1
  %v804 = vmax.f32 %v802, %v803
  %v805 = vsel %vm748, %v630, -inf
  %v806 = vrot.slane %v805, 4
  %v807 = vmax.f32 %v805, %v806
  %v808 = vrot.slane %v807, 2
  %v809 = vmax.f32 %v807, %v808
  %v810 = vrot.slane %v809, 1
  %v811 = vmax.f32 %v809, %v810
  %v812 = vsel %vm748, %v635, -inf
  %v813 = vrot.slane %v812, 4
  %v814 = vmax.f32 %v812, %v813
  %v815 = vrot.slane %v814, 2
  %v816 = vmax.f32 %v814, %v815
  %v817 = vrot.slane %v816, 1
  %v818 = vmax.f32 %v816, %v817
  %v819 = vsel %vm748, %v640, -inf
  %v820 = vrot.slane %v819, 4
  %v821 = vmax.f32 %v819, %v820
  %v822 = vrot.slane %v821, 2
  %v823 = vmax.f32 %v821, %v822
  %v824 = vrot.slane %v823, 1
  %v825 = vmax.f32 %v823, %v824
  %v826 = vsel %vm748, %v645, -inf
  %v827 = vrot.slane %v826, 4
  %v828 = vmax.f32 %v826, %v827
  %v829 = vrot.slane %v828, 2
  %v830 = vmax.f32 %v828, %v829
  %v831 = vrot.slane %v830, 1
  %v832 = vmax.f32 %v830, %v831
  %v833 = vsel %vm748, %v650, -inf
  %v834 = vrot.slane %v833, 4
  %v835 = vmax.f32 %v833, %v834
  %v836 = vrot.slane %v835, 2
  %v837 = vmax.f32 %v835, %v836
  %v838 = vrot.slane %v837, 1
  %v839 = vmax.f32 %v837, %v838
  %v840 = vsel %vm748, %v655, -inf
  %v841 = vrot.slane %v840, 4
  %v842 = vmax.f32 %v840, %v841
  %v843 = vrot.slane %v842, 2
  %v844 = vmax.f32 %v842, %v843
  %v845 = vrot.slane %v844, 1
  %v846 = vmax.f32 %v844, %v845
  %v847 = vsel %vm748, %v660, -inf
  %v848 = vrot.slane %v847, 4
  %v849 = vmax.f32 %v847, %v848
  %v850 = vrot.slane %v849, 2
  %v851 = vmax.f32 %v849, %v850
  %v852 = vrot.slane %v851, 1
  %v853 = vmax.f32 %v851, %v852
  %v854 = vsel %vm748, %v665, -inf
  %v855 = vrot.slane %v854, 4
  %v856 = vmax.f32 %v854, %v855
  %v857 = vrot.slane %v856, 2
  %v858 = vmax.f32 %v856, %v857
  %v859 = vrot.slane %v858, 1
  %v860 = vmax.f32 %v858, %v859
  %v861 = vsel %vm748, %v670, -inf
  %v862 = vrot.slane %v861, 4
  %v863 = vmax.f32 %v861, %v862
  %v864 = vrot.slane %v863, 2
  %v865 = vmax.f32 %v863, %v864
  %v866 = vrot.slane %v865, 1
  %v867 = vmax.f32 %v865, %v866
  %v868 = vsel %vm748, %v675, -inf
  %v869 = vrot.slane %v868, 4
  %v870 = vmax.f32 %v868, %v869
  %v871 = vrot.slane %v870, 2
  %v872 = vmax.f32 %v870, %v871
  %v873 = vrot.slane %v872, 1
  %v874 = vmax.f32 %v872, %v873
  %v875 = vsel %vm748, %v680, -inf
  %v876 = vrot.slane %v875, 4
  %v877 = vmax.f32 %v875, %v876
  %v878 = vrot.slane %v877, 2
  %v879 = vmax.f32 %v877, %v878
  %v880 = vrot.slane %v879, 1
  %v881 = vmax.f32 %v879, %v880
  %v882 = vsel %vm748, %v685, -inf
  %v883 = vrot.slane %v882, 4
  %v884 = vmax.f32 %v882, %v883
  %v885 = vrot.slane %v884, 2
  %v886 = vmax.f32 %v884, %v885
  %v887 = vrot.slane %v886, 1
  %v888 = vmax.f32 %v886, %v887
  %v889 = vsel %vm748, %v690, -inf
  %v890 = vrot.slane %v889, 4
  %v891 = vmax.f32 %v889, %v890
  %v892 = vrot.slane %v891, 2
  %v893 = vmax.f32 %v891, %v892
  %v894 = vrot.slane %v893, 1
  %v895 = vmax.f32 %v893, %v894
  %v896 = vsel %vm748, %v695, -inf
  %v897 = vrot.slane %v896, 4
  %v898 = vmax.f32 %v896, %v897
  %v899 = vrot.slane %v898, 2
  %v900 = vmax.f32 %v898, %v899
  %v901 = vrot.slane %v900, 1
  %v902 = vmax.f32 %v900, %v901
  %v903 = vsel %vm748, %v700, -inf
  %v904 = vrot.slane %v903, 4
  %v905 = vmax.f32 %v903, %v904
  %v906 = vrot.slane %v905, 2
  %v907 = vmax.f32 %v905, %v906
  %v908 = vrot.slane %v907, 1
  %v909 = vmax.f32 %v907, %v908
  %v910 = vsel %vm748, %v705, -inf
  %v911 = vrot.slane %v910, 4
  %v912 = vmax.f32 %v910, %v911
  %v913 = vrot.slane %v912, 2
  %v914 = vmax.f32 %v912, %v913
  %v915 = vrot.slane %v914, 1
  %v916 = vmax.f32 %v914, %v915
  %v917 = vsel %vm748, %v710, -inf
  %v918 = vrot.slane %v917, 4
  %v919 = vmax.f32 %v917, %v918
  %v920 = vrot.slane %v919, 2
  %v921 = vmax.f32 %v919, %v920
  %v922 = vrot.slane %v921, 1
  %v923 = vmax.f32 %v921, %v922
  %v924 = vsel %vm748, %v715, -inf
  %v925 = vrot.slane %v924, 4
  %v926 = vmax.f32 %v924, %v925
  %v927 = vrot.slane %v926, 2
  %v928 = vmax.f32 %v926, %v927
  %v929 = vrot.slane %v928, 1
  %v930 = vmax.f32 %v928, %v929
  %v931 = vsel %vm748, %v720, -inf
  %v932 = vrot.slane %v931, 4
  %v933 = vmax.f32 %v931, %v932
  %v934 = vrot.slane %v933, 2
  %v935 = vmax.f32 %v933, %v934
  %v936 = vrot.slane %v935, 1
  %v937 = vmax.f32 %v935, %v936
  %v938 = vsel %vm748, %v725, -inf
  %v939 = vrot.slane %v938, 4
  %v940 = vmax.f32 %v938, %v939
  %v941 = vrot.slane %v940, 2
  %v942 = vmax.f32 %v940, %v941
  %v943 = vrot.slane %v942, 1
  %v944 = vmax.f32 %v942, %v943
  %v945 = vsel %vm748, %v730, -inf
  %v946 = vrot.slane %v945, 4
  %v947 = vmax.f32 %v945, %v946
  %v948 = vrot.slane %v947, 2
  %v949 = vmax.f32 %v947, %v948
  %v950 = vrot.slane %v949, 1
  %v951 = vmax.f32 %v949, %v950
  %v952 = vsel %vm748, %v735, -inf
  %v953 = vrot.slane %v952, 4
  %v954 = vmax.f32 %v952, %v953
  %v955 = vrot.slane %v954, 2
  %v956 = vmax.f32 %v954, %v955
  %v957 = vrot.slane %v956, 1
  %v958 = vmax.f32 %v956, %v957
  %v959 = vsel %vm748, %v740, -inf
  %v960 = vrot.slane %v959, 4
  %v961 = vmax.f32 %v959, %v960
  %v962 = vrot.slane %v961, 2
  %v963 = vmax.f32 %v961, %v962
  %v964 = vrot.slane %v963, 1
  %v965 = vmax.f32 %v963, %v964
  %v966 = vsel %vm748, %v745, -inf
  %v967 = vrot.slane %v966, 4
  %v968 = vmax.f32 %v966, %v967
  %v969 = vrot.slane %v968, 2
  %v970 = vmax.f32 %v968, %v969
  %v971 = vrot.slane %v970, 1
  %v972 = vmax.f32 %v970, %v971
  %v973 = vsub.f32 %v590, %v755
  %v974 = vsub.f32 %v595, %v762
  %v975 = vsub.f32 %v600, %v769
  %v976 = vsub.f32 %v605, %v776
  %v977 = vsub.f32 %v610, %v783
  %v978 = vsub.f32 %v615, %v790
  %v979 = vsub.f32 %v620, %v797
  %v980 = vsub.f32 %v625, %v804
  %v981 = vsub.f32 %v630, %v811
  %v982 = vsub.f32 %v635, %v818
  %v983 = vsub.f32 %v640, %v825
  %v984 = vsub.f32 %v645, %v832
  %v985 = vsub.f32 %v650, %v839
  %v986 = vsub.f32 %v655, %v846
  %v987 = vsub.f32 %v660, %v853
  %v988 = vsub.f32 %v665, %v860
  %v989 = vsub.f32 %v670, %v867
  %v990 = vsub.f32 %v675, %v874
  %v991 = vsub.f32 %v680, %v881
  %v992 = vsub.f32 %v685, %v888
  %v993 = vsub.f32 %v690, %v895
  %v994 = vsub.f32 %v695, %v902
  %v995 = vsub.f32 %v700, %v909
  %v996 = vsub.f32 %v705, %v916
  %v997 = vsub.f32 %v710, %v923
  %v998 = vsub.f32 %v715, %v930
  %v999 = vsub.f32 %v720, %v937
  %v1000 = vsub.f32 %v725, %v944
  %v1001 = vsub.f32 %v730, %v951
  %v1002 = vsub.f32 %v735, %v958
  %v1003 = vsub.f32 %v740, %v965
  %v1004 = vsub.f32 %v745, %v972
  %v1005 = vmul.f32 %v973, 1.442695
  %v1006 = vpow.pop %v1005
  %v1007 = vmul.f32 %v974, 1.442695
  %v1008 = vpow.pop %v1007
  %v1009 = vmul.f32 %v975, 1.442695
  %v1010 = vpow.pop %v1009
  %v1011 = vmul.f32 %v976, 1.442695
  %v1012 = vpow.pop %v1011
  %v1013 = vmul.f32 %v977, 1.442695
  %v1014 = vpow.pop %v1013
  %v1015 = vmul.f32 %v978, 1.442695
  %v1016 = vpow.pop %v1015
  %v1017 = vmul.f32 %v979, 1.442695
  %v1018 = vpow.pop %v1017
  %v1019 = vmul.f32 %v980, 1.442695
  %v1020 = vpow.pop %v1019
  %v1021 = vmul.f32 %v981, 1.442695
  %v1022 = vpow.pop %v1021
  %v1023 = vmul.f32 %v982, 1.442695
  %v1024 = vpow.pop %v1023
  %v1025 = vmul.f32 %v983, 1.442695
  %v1026 = vpow.pop %v1025
  %v1027 = vmul.f32 %v984, 1.442695
  %v1028 = vpow.pop %v1027
  %v1029 = vmul.f32 %v985, 1.442695
  %v1030 = vpow.pop %v1029
  %v1031 = vmul.f32 %v986, 1.442695
  %v1032 = vpow.pop %v1031
  %v1033 = vmul.f32 %v987, 1.442695
  %v1034 = vpow.pop %v1033
  %v1035 = vmul.f32 %v988, 1.442695
  %v1036 = vpow.pop %v1035
  %v1037 = vmul.f32 %v989, 1.442695
  %v1038 = vpow.pop %v1037
  %v1039 = vmul.f32 %v990, 1.442695
  %v1040 = vpow.pop %v1039
  %v1041 = vmul.f32 %v991, 1.442695
  %v1042 = vpow.pop %v1041
  %v1043 = vmul.f32 %v992, 1.442695
  %v1044 = vpow.pop %v1043
  %v1045 = vmul.f32 %v993, 1.442695
  %v1046 = vpow.pop %v1045
  %v1047 = vmul.f32 %v994, 1.442695
  %v1048 = vpow.pop %v1047
  %v1049 = vmul.f32 %v995, 1.442695
  %v1050 = vpow.pop %v1049
  %v1051 = vmul.f32 %v996, 1.442695
  %v1052 = vpow.pop %v1051
  %v1053 = vmul.f32 %v997, 1.442695
  %v1054 = vpow.pop %v1053
  %v1055 = vmul.f32 %v998, 1.442695
  %v1056 = vpow.pop %v1055
  %v1057 = vmul.f32 %v999, 1.442695
  %v1058 = vpow.pop %v1057
  %v1059 = vmul.f32 %v1000, 1.442695
  %v1060 = vpow.pop %v1059
  %v1061 = vmul.f32 %v1001, 1.442695
  %v1062 = vpow.pop %v1061
  %v1063 = vmul.f32 %v1002, 1.442695
  %v1064 = vpow.pop %v1063
  %v1065 = vmul.f32 %v1003, 1.442695
  %v1066 = vpow.pop %v1065
  %v1067 = vmul.f32 %v1004, 1.442695
  %v1068 = vpow.pop %v1067
  %v1069 = vsel %vm748, %v1006, 0.0
  %v1070 = vrot.slane %v1069, 4
  %v1071 = vadd.f32 %v1069, %v1070
  %v1072 = vrot.slane %v1071, 2
  %v1073 = vadd.f32 %v1071, %v1072
  %v1074 = vrot.slane %v1073, 1
  %v1075 = vadd.f32 %v1073, %v1074
  %v1076 = vsel %vm748, %v1008, 0.0
  %v1077 = vrot.slane %v1076, 4
  %v1078 = vadd.f32 %v1076, %v1077
  %v1079 = vrot.slane %v1078, 2
  %v1080 = vadd.f32 %v1078, %v1079
  %v1081 = vrot.slane %v1080, 1
  %v1082 = vadd.f32 %v1080, %v1081
  %v1083 = vsel %vm748, %v1010, 0.0
  %v1084 = vrot.slane %v1083, 4
  %v1085 = vadd.f32 %v1083, %v1084
  %v1086 = vrot.slane %v1085, 2
  %v1087 = vadd.f32 %v1085, %v1086
  %v1088 = vrot.slane %v1087, 1
  %v1089 = vadd.f32 %v1087, %v1088
  %v1090 = vsel %vm748, %v1012, 0.0
  %v1091 = vrot.slane %v1090, 4
  %v1092 = vadd.f32 %v1090, %v1091
  %v1093 = vrot.slane %v1092, 2
  %v1094 = vadd.f32 %v1092, %v1093
  %v1095 = vrot.slane %v1094, 1
  %v1096 = vadd.f32 %v1094, %v1095
  %v1097 = vsel %vm748, %v1014, 0.0
  %v1098 = vrot.slane %v1097, 4
  %v1099 = vadd.f32 %v1097, %v1098
  %v1100 = vrot.slane %v1099, 2
  %v1101 = vadd.f32 %v1099, %v1100
  %v1102 = vrot.slane %v1101, 1
  %v1103 = vadd.f32 %v1101, %v1102
  %v1104 = vsel %vm748, %v1016, 0.0
  %v1105 = vrot.slane %v1104, 4
  %v1106 = vadd.f32 %v1104, %v1105
  %v1107 = vrot.slane %v1106, 2
  %v1108 = vadd.f32 %v1106, %v1107
  %v1109 = vrot.slane %v1108, 1
  %v1110 = vadd.f32 %v1108, %v1109
  %v1111 = vsel %vm748, %v1018, 0.0
  %v1112 = vrot.slane %v1111, 4
  %v1113 = vadd.f32 %v1111, %v1112
  %v1114 = vrot.slane %v1113, 2
  %v1115 = vadd.f32 %v1113, %v1114
  %v1116 = vrot.slane %v1115, 1
  %v1117 = vadd.f32 %v1115, %v1116
  %v1118 = vsel %vm748, %v1020, 0.0
  %v1119 = vrot.slane %v1118, 4
  %v1120 = vadd.f32 %v1118, %v1119
  %v1121 = vrot.slane %v1120, 2
  %v1122 = vadd.f32 %v1120, %v1121
  %v1123 = vrot.slane %v1122, 1
  %v1124 = vadd.f32 %v1122, %v1123
  %v1125 = vsel %vm748, %v1022, 0.0
  %v1126 = vrot.slane %v1125, 4
  %v1127 = vadd.f32 %v1125, %v1126
  %v1128 = vrot.slane %v1127, 2
  %v1129 = vadd.f32 %v1127, %v1128
  %v1130 = vrot.slane %v1129, 1
  %v1131 = vadd.f32 %v1129, %v1130
  %v1132 = vsel %vm748, %v1024, 0.0
  %v1133 = vrot.slane %v1132, 4
  %v1134 = vadd.f32 %v1132, %v1133
  %v1135 = vrot.slane %v1134, 2
  %v1136 = vadd.f32 %v1134, %v1135
  %v1137 = vrot.slane %v1136, 1
  %v1138 = vadd.f32 %v1136, %v1137
  %v1139 = vsel %vm748, %v1026, 0.0
  %v1140 = vrot.slane %v1139, 4
  %v1141 = vadd.f32 %v1139, %v1140
  %v1142 = vrot.slane %v1141, 2
  %v1143 = vadd.f32 %v1141, %v1142
  %v1144 = vrot.slane %v1143, 1
  %v1145 = vadd.f32 %v1143, %v1144
  %v1146 = vsel %vm748, %v1028, 0.0
  %v1147 = vrot.slane %v1146, 4
  %v1148 = vadd.f32 %v1146, %v1147
  %v1149 = vrot.slane %v1148, 2
  %v1150 = vadd.f32 %v1148, %v1149
  %v1151 = vrot.slane %v1150, 1
  %v1152 = vadd.f32 %v1150, %v1151
  %v1153 = vsel %vm748, %v1030, 0.0
  %v1154 = vrot.slane %v1153, 4
  %v1155 = vadd.f32 %v1153, %v1154
  %v1156 = vrot.slane %v1155, 2
  %v1157 = vadd.f32 %v1155, %v1156
  %v1158 = vrot.slane %v1157, 1
  %v1159 = vadd.f32 %v1157, %v1158
  %v1160 = vsel %vm748, %v1032, 0.0
  %v1161 = vrot.slane %v1160, 4
  %v1162 = vadd.f32 %v1160, %v1161
  %v1163 = vrot.slane %v1162, 2
  %v1164 = vadd.f32 %v1162, %v1163
  %v1165 = vrot.slane %v1164, 1
  %v1166 = vadd.f32 %v1164, %v1165
  %v1167 = vsel %vm748, %v1034, 0.0
  %v1168 = vrot.slane %v1167, 4
  %v1169 = vadd.f32 %v1167, %v1168
  %v1170 = vrot.slane %v1169, 2
  %v1171 = vadd.f32 %v1169, %v1170
  %v1172 = vrot.slane %v1171, 1
  %v1173 = vadd.f32 %v1171, %v1172
  %v1174 = vsel %vm748, %v1036, 0.0
  %v1175 = vrot.slane %v1174, 4
  %v1176 = vadd.f32 %v1174, %v1175
  %v1177 = vrot.slane %v1176, 2
  %v1178 = vadd.f32 %v1176, %v1177
  %v1179 = vrot.slane %v1178, 1
  %v1180 = vadd.f32 %v1178, %v1179
  %v1181 = vsel %vm748, %v1038, 0.0
  %v1182 = vrot.slane %v1181, 4
  %v1183 = vadd.f32 %v1181, %v1182
  %v1184 = vrot.slane %v1183, 2
  %v1185 = vadd.f32 %v1183, %v1184
  %v1186 = vrot.slane %v1185, 1
  %v1187 = vadd.f32 %v1185, %v1186
  %v1188 = vsel %vm748, %v1040, 0.0
  %v1189 = vrot.slane %v1188, 4
  %v1190 = vadd.f32 %v1188, %v1189
  %v1191 = vrot.slane %v1190, 2
  %v1192 = vadd.f32 %v1190, %v1191
  %v1193 = vrot.slane %v1192, 1
  %v1194 = vadd.f32 %v1192, %v1193
  %v1195 = vsel %vm748, %v1042, 0.0
  %v1196 = vrot.slane %v1195, 4
  %v1197 = vadd.f32 %v1195, %v1196
  %v1198 = vrot.slane %v1197, 2
  %v1199 = vadd.f32 %v1197, %v1198
  %v1200 = vrot.slane %v1199, 1
  %v1201 = vadd.f32 %v1199, %v1200
  %v1202 = vsel %vm748, %v1044, 0.0
  %v1203 = vrot.slane %v1202, 4
  %v1204 = vadd.f32 %v1202, %v1203
  %v1205 = vrot.slane %v1204, 2
  %v1206 = vadd.f32 %v1204, %v1205
  %v1207 = vrot.slane %v1206, 1
  %v1208 = vadd.f32 %v1206, %v1207
  %v1209 = vsel %vm748, %v1046, 0.0
  %v1210 = vrot.slane %v1209, 4
  %v1211 = vadd.f32 %v1209, %v1210
  %v1212 = vrot.slane %v1211, 2
  %v1213 = vadd.f32 %v1211, %v1212
  %v1214 = vrot.slane %v1213, 1
  %v1215 = vadd.f32 %v1213, %v1214
  %v1216 = vsel %vm748, %v1048, 0.0
  %v1217 = vrot.slane %v1216, 4
  %v1218 = vadd.f32 %v1216, %v1217
  %v1219 = vrot.slane %v1218, 2
  %v1220 = vadd.f32 %v1218, %v1219
  %v1221 = vrot.slane %v1220, 1
  %v1222 = vadd.f32 %v1220, %v1221
  %v1223 = vsel %vm748, %v1050, 0.0
  %v1224 = vrot.slane %v1223, 4
  %v1225 = vadd.f32 %v1223, %v1224
  %v1226 = vrot.slane %v1225, 2
  %v1227 = vadd.f32 %v1225, %v1226
  %v1228 = vrot.slane %v1227, 1
  %v1229 = vadd.f32 %v1227, %v1228
  %v1230 = vsel %vm748, %v1052, 0.0
  %v1231 = vrot.slane %v1230, 4
  %v1232 = vadd.f32 %v1230, %v1231
  %v1233 = vrot.slane %v1232, 2
  %v1234 = vadd.f32 %v1232, %v1233
  %v1235 = vrot.slane %v1234, 1
  %v1236 = vadd.f32 %v1234, %v1235
  %v1237 = vsel %vm748, %v1054, 0.0
  %v1238 = vrot.slane %v1237, 4
  %v1239 = vadd.f32 %v1237, %v1238
  %v1240 = vrot.slane %v1239, 2
  %v1241 = vadd.f32 %v1239, %v1240
  %v1242 = vrot.slane %v1241, 1
  %v1243 = vadd.f32 %v1241, %v1242
  %v1244 = vsel %vm748, %v1056, 0.0
  %v1245 = vrot.slane %v1244, 4
  %v1246 = vadd.f32 %v1244, %v1245
  %v1247 = vrot.slane %v1246, 2
  %v1248 = vadd.f32 %v1246, %v1247
  %v1249 = vrot.slane %v1248, 1
  %v1250 = vadd.f32 %v1248, %v1249
  %v1251 = vsel %vm748, %v1058, 0.0
  %v1252 = vrot.slane %v1251, 4
  %v1253 = vadd.f32 %v1251, %v1252
  %v1254 = vrot.slane %v1253, 2
  %v1255 = vadd.f32 %v1253, %v1254
  %v1256 = vrot.slane %v1255, 1
  %v1257 = vadd.f32 %v1255, %v1256
  %v1258 = vsel %vm748, %v1060, 0.0
  %v1259 = vrot.slane %v1258, 4
  %v1260 = vadd.f32 %v1258, %v1259
  %v1261 = vrot.slane %v1260, 2
  %v1262 = vadd.f32 %v1260, %v1261
  %v1263 = vrot.slane %v1262, 1
  %v1264 = vadd.f32 %v1262, %v1263
  %v1265 = vsel %vm748, %v1062, 0.0
  %v1266 = vrot.slane %v1265, 4
  %v1267 = vadd.f32 %v1265, %v1266
  %v1268 = vrot.slane %v1267, 2
  %v1269 = vadd.f32 %v1267, %v1268
  %v1270 = vrot.slane %v1269, 1
  %v1271 = vadd.f32 %v1269, %v1270
  %v1272 = vsel %vm748, %v1064, 0.0
  %v1273 = vrot.slane %v1272, 4
  %v1274 = vadd.f32 %v1272, %v1273
  %v1275 = vrot.slane %v1274, 2
  %v1276 = vadd.f32 %v1274, %v1275
  %v1277 = vrot.slane %v1276, 1
  %v1278 = vadd.f32 %v1276, %v1277
  %v1279 = vsel %vm748, %v1066, 0.0
  %v1280 = vrot.slane %v1279, 4
  %v1281 = vadd.f32 %v1279, %v1280
  %v1282 = vrot.slane %v1281, 2
  %v1283 = vadd.f32 %v1281, %v1282
  %v1284 = vrot.slane %v1283, 1
  %v1285 = vadd.f32 %v1283, %v1284
  %v1286 = vsel %vm748, %v1068, 0.0
  %v1287 = vrot.slane %v1286, 4
  %v1288 = vadd.f32 %v1286, %v1287
  %v1289 = vrot.slane %v1288, 2
  %v1290 = vadd.f32 %v1288, %v1289
  %v1291 = vrot.slane %v1290, 1
  %v1292 = vadd.f32 %v1290, %v1291
  %v1293 = vrcp.pop %v1075
  %v1294 = vmul.f32 %v1006, %v1293
  %v1295 = vrcp.pop %v1082
  %v1296 = vmul.f32 %v1008, %v1295
  %v1297 = vrcp.pop %v1089
  %v1298 = vmul.f32 %v1010, %v1297
  %v1299 = vrcp.pop %v1096
  %v1300 = vmul.f32 %v1012, %v1299
  %v1301 = vrcp.pop %v1103
  %v1302 = vmul.f32 %v1014, %v1301
  %v1303 = vrcp.pop %v1110
  %v1304 = vmul.f32 %v1016, %v1303
  %v1305 = vrcp.pop %v1117
  %v1306 = vmul.f32 %v1018, %v1305
  %v1307 = vrcp.pop %v1124
  %v1308 = vmul.f32 %v1020, %v1307
  %v1309 = vrcp.pop %v1131
  %v1310 = vmul.f32 %v1022, %v1309
  %v1311 = vrcp.pop %v1138
  %v1312 = vmul.f32 %v1024, %v1311
  %v1313 = vrcp.pop %v1145
  %v1314 = vmul.f32 %v1026, %v1313
  %v1315 = vrcp.pop %v1152
  %v1316 = vmul.f32 %v1028, %v1315
  %v1317 = vrcp.pop %v1159
  %v1318 = vmul.f32 %v1030, %v1317
  %v1319 = vrcp.pop %v1166
  %v1320 = vmul.f32 %v1032, %v1319
  %v1321 = vrcp.pop %v1173
  %v1322 = vmul.f32 %v1034, %v1321
  %v1323 = vrcp.pop %v1180
  %v1324 = vmul.f32 %v1036, %v1323
  %v1325 = vrcp.pop %v1187
  %v1326 = vmul.f32 %v1038, %v1325
  %v1327 = vrcp.pop %v1194
  %v1328 = vmul.f32 %v1040, %v1327
  %v1329 = vrcp.pop %v1201
  %v1330 = vmul.f32 %v1042, %v1329
  %v1331 = vrcp.pop %v1208
  %v1332 = vmul.f32 %v1044, %v1331
  %v1333 = vrcp.pop %v1215
  %v1334 = vmul.f32 %v1046, %v1333
  %v1335 = vrcp.pop %v1222
  %v1336 = vmul.f32 %v1048, %v1335
  %v1337 = vrcp.pop %v1229
  %v1338 = vmul.f32 %v1050, %v1337
  %v1339 = vrcp.pop %v1236
  %v1340 = vmul.f32 %v1052, %v1339
  %v1341 = vrcp.pop %v1243
  %v1342 = vmul.f32 %v1054, %v1341
  %v1343 = vrcp.pop %v1250
  %v1344 = vmul.f32 %v1056, %v1343
  %v1345 = vrcp.pop %v1257
  %v1346 = vmul.f32 %v1058, %v1345
  %v1347 = vrcp.pop %v1264
  %v1348 = vmul.f32 %v1060, %v1347
  %v1349 = vrcp.pop %v1271
  %v1350 = vmul.f32 %v1062, %v1349
  %v1351 = vrcp.pop %v1278
  %v1352 = vmul.f32 %v1064, %v1351
  %v1353 = vrcp.pop %v1285
  %v1354 = vmul.f32 %v1066, %v1353
  %v1355 = vrcp.pop %v1292
  %v1356 = vmul.f32 %v1068, %v1355
  %1357 = vst.msk [vmem:[%s5] sm:$0xff] %vm748, %v1294
  %1358 = vst.msk [vmem:[%s5 + $0x8] sm:$0xff] %vm748, %v1296
  %1359 = vst.msk [vmem:[%s5 + $0x10] sm:$0xff] %vm748, %v1298
  %1360 = vst.msk [vmem:[%s5 + $0x18] sm:$0xff] %vm748, %v1300
  %1361 = vst.msk [vmem:[%s5 + $0x20] sm:$0xff] %vm748, %v1302
  %1362 = vst.msk [vmem:[%s5 + $0x28] sm:$0xff] %vm748, %v1304
  %1363 = vst.msk [vmem:[%s5 + $0x30] sm:$0xff] %vm748, %v1306
  %1364 = vst.msk [vmem:[%s5 + $0x38] sm:$0xff] %vm748, %v1308
  %1365 = vst.msk [vmem:[%s5 + $0x40] sm:$0xff] %vm748, %v1310
  %1366 = vst.msk [vmem:[%s5 + $0x48] sm:$0xff] %vm748, %v1312
  %1367 = vst.msk [vmem:[%s5 + $0x50] sm:$0xff] %vm748, %v1314
  %1368 = vst.msk [vmem:[%s5 + $0x58] sm:$0xff] %vm748, %v1316
  %1369 = vst.msk [vmem:[%s5 + $0x60] sm:$0xff] %vm748, %v1318
  %1370 = vst.msk [vmem:[%s5 + $0x68] sm:$0xff] %vm748, %v1320
  %1371 = vst.msk [vmem:[%s5 + $0x70] sm:$0xff] %vm748, %v1322
  %1372 = vst.msk [vmem:[%s5 + $0x78] sm:$0xff] %vm748, %v1324
  %1373 = vst.msk [vmem:[%s5 + $0x80] sm:$0xff] %vm748, %v1326
  %1374 = vst.msk [vmem:[%s5 + $0x88] sm:$0xff] %vm748, %v1328
  %1375 = vst.msk [vmem:[%s5 + $0x90] sm:$0xff] %vm748, %v1330
  %1376 = vst.msk [vmem:[%s5 + $0x98] sm:$0xff] %vm748, %v1332
  %1377 = vst.msk [vmem:[%s5 + $0xa0] sm:$0xff] %vm748, %v1334
  %1378 = vst.msk [vmem:[%s5 + $0xa8] sm:$0xff] %vm748, %v1336
  %1379 = vst.msk [vmem:[%s5 + $0xb0] sm:$0xff] %vm748, %v1338
  %1380 = vst.msk [vmem:[%s5 + $0xb8] sm:$0xff] %vm748, %v1340
  %1381 = vst.msk [vmem:[%s5 + $0xc0] sm:$0xff] %vm748, %v1342
  %1382 = vst.msk [vmem:[%s5 + $0xc8] sm:$0xff] %vm748, %v1344
  %1383 = vst.msk [vmem:[%s5 + $0xd0] sm:$0xff] %vm748, %v1346
  %1384 = vst.msk [vmem:[%s5 + $0xd8] sm:$0xff] %vm748, %v1348
  %1385 = vst.msk [vmem:[%s5 + $0xe0] sm:$0xff] %vm748, %v1350
  %1386 = vst.msk [vmem:[%s5 + $0xe8] sm:$0xff] %vm748, %v1352
  %1387 = vst.msk [vmem:[%s5 + $0xf0] sm:$0xff] %vm748, %v1354
  %1388 = vst.msk [vmem:[%s5 + $0xf8] sm:$0xff] %vm748, %v1356
  // Predicated region
  $region22: #{tpu_custom_call.1} parent=0 // pred_check
    _
  $region23: #{tpu_custom_call.1} parent=0 // pred_check_branch
    %1390 = sbr.rel (0) target = $region25
  $region24: #{tpu_custom_call.1} parent=0 // pred_region
    _
  $region25: #{tpu_custom_call.1} parent=0 // pred_fallthru
    _
  // Predicated region
  $region26: #{tpu_custom_call.1} parent=0 // pred_check
    _
  $region27: #{tpu_custom_call.1} parent=0 // pred_check_branch
    %1392 = sbr.rel (0) target = $region29
  $region28: #{tpu_custom_call.1} parent=0 // pred_region
    _
  $region29: #{tpu_custom_call.1} parent=0 // pred_fallthru
    _

</llo_original>
